<compile_context>
chip_gen: v6e
topology: v6e:2x2x1
jax: 0.10.0
libtpu: 0.0.40
codegen_flags: <defaults>
</compile_context>

<pallas_src>
import functools

import jax
import jax.numpy as jnp
from jax import lax
from jax.experimental import pallas as pl
from jax.experimental.pallas import tpu as pltpu


def _criterion_kernel(x_ref, out_ref, *, T, negM, B, TM, partner_slab):
    """One (TM, D) row slab of the loss against the resident full x (B, D)."""
    i = pl.program_id(0)
    row0 = i * TM

    # Row slab is a VMEM slice of the resident full-x block (single input).
    x_t = x_ref[pl.ds(pl.multiple_of(row0, TM), TM), :]           # (TM, D)
    x_f = x_ref[...]                                              # (B,  D)

    # sim = (x_tile @ x_full^T) / T ; operands stay in storage dtype (bf16 by
    # default), f32 accumulation on the MXU, contracting dim 1 of both
    # operands so no transposed (D, B) copy is materialized.
    sim = lax.dot_general(
        x_t, x_f,
        dimension_numbers=(((1,), (1,)), ((), ())),
        preferred_element_type=jnp.float32) * (1.0 / T)           # (TM, B)

    # Safe-softmax shift: every downstream quantity is a per-row ratio of
    # exps, so subtracting the per-row max cancels exactly (overflow-proof).
    row_max = jnp.max(sim, axis=1, keepdims=True)                 # (TM, 1)
    sim = sim - row_max

    # Diagonal mask: one lane iota vs. a (TM, 1) row index (no (TM, B) row
    # iota temp).  Diagonal contributes log(1 - 0) = 0 below, as in torch.
    col = lax.broadcasted_iota(jnp.int32, (TM, B), 1)
    row_idx = lax.broadcasted_iota(jnp.int32, (TM, 1), 0) + row0  # (TM, 1)

    all_prob = jnp.where(col == row_idx, 0.0, jnp.exp(sim))       # (TM, B)
    row_sum = jnp.sum(all_prob, axis=1, keepdims=True)            # (TM, 1)

    if partner_slab:
        # Positive pair of global row r is row (r + B/2) mod B.  With
        # (B/2) % TM == 0 the partner rows of this slab are contiguous, so
        # `pos` is an O(TM*D) VPU dot instead of a masked (TM, B) select.
        p0 = row0 + (B // 2)
        p0 = jnp.where(p0 >= B, p0 - B, p0)
        x_p = x_ref[pl.ds(pl.multiple_of(p0, TM), TM), :]         # (TM, D)
        pos_sim = jnp.sum(x_t.astype(jnp.float32) * x_p.astype(jnp.float32),
                          axis=1, keepdims=True) * (1.0 / T)
        pos = jnp.exp(pos_sim - row_max)                          # (TM, 1)
    else:
        pc = row_idx + (B // 2)
        pos_col = jnp.where(pc >= B, pc - B, pc)                  # (TM, 1)
        pos = jnp.sum(jnp.where(col == pos_col, all_prob, 0.0),
                      axis=1, keepdims=True)                      # (TM, 1)

    if negM == 1.0:
        all_div = row_sum
    else:
        all_div = (row_sum - pos) * negM + pos

    inv_div = pl.reciprocal(all_div)       # exact per-row reciprocal (EUP)
    lnPmt = pos * inv_div                                         # (TM, 1)

    # lnPon[r] = sum_j log(1 - all_prob[r,j]/all_div[r]) - log(1 - lnPmt[r])
    lnPon_mat = jnp.log(1.0 - all_prob * inv_div)                 # (TM, B)
    lnPon = jnp.sum(lnPon_mat, axis=1, keepdims=True) - jnp.log(1.0 - lnPmt)

    # Per-row contribution to (lnPmtsum + negM * lnPonsum).
    out_ref[...] = jnp.log(lnPmt) + negM * lnPon                  # (TM, 1)


def _device_vmem_bytes():
    try:
        cap = getattr(pltpu.get_tpu_info(), "vmem_capacity_bytes", None)
        if cap:
            return int(cap)
    except Exception:
        pass
    return 64 << 20   # conservative default (v7x per-TensorCore)


def _max_row_tile():
    try:
        kind = jax.devices()[0].device_kind.lower()
    except Exception:
        return 256
    # v5e: 4x128^2 MXU — TM=256 buys nothing, doubles (TM,B) temp pressure.
    if "v5 lite" in kind or "v5e" in kind or "v5lite" in kind:
        return 128
    return 256


def _vmem_estimate(B, D, tm, x_itemsize):
    resident_x = B * D * x_itemsize          # single-buffered full x
    big_temps = 5 * tm * B * 4               # sim / all_prob / log / mask tmp
    small = 3 * tm * D * 4 + 16 * tm * 4
    return resident_x + big_temps + small + (1 << 16)


def _pick_row_tile(B, D, x_itemsize, vmem_budget, max_tm):
    divisors = [t for t in (256, 128, 64, 32, 16, 8)
                if t <= max_tm and t <= B and B % t == 0]
    for tm in divisors:
        if _vmem_estimate(B, D, tm, x_itemsize) <= vmem_budget:
            return tm
    if divisors:
        return divisors[-1]   # best effort: smallest aligned divisor
    return B                  # irregular B: whole-array block


_SINGLE_BUFFER_OK = None      # memoized: does this jax support pl.Buffered(1)?


def criterion_forward(x, y=None, T=0.07, negM=1.0, *,
                      mxu_dtype=jnp.bfloat16, row_tile=None):
    """Pallas equivalent of Criterion(negM, T, batchSize, device)(x, y).

    `y` is accepted for signature parity but (as in the PyTorch module's
    forward) is not used by the loss.
    """
    del y
    B, D = x.shape
    assert B % 2 == 0, "Criterion expects 2 * batchSize rows"

    x_in = x if x.dtype == mxu_dtype else x.astype(mxu_dtype)
    itemsize = jnp.dtype(mxu_dtype).itemsize

    vmem_cap = _device_vmem_bytes()
    vmem_budget = max(vmem_cap - (16 << 20), vmem_cap // 2)

    if row_tile is None:
        TM = _pick_row_tile(B, D, itemsize, vmem_budget, _max_row_tile())
    else:
        TM = int(row_tile)
        assert B % TM == 0 and (TM % 8 == 0 or TM == B), (B, TM)
    num_tiles = B // TM

    # Contiguous partner slab exists when (B/2) is a multiple of the tile.
    partner_slab = (B // 2) % TM == 0

    kernel = functools.partial(_criterion_kernel, T=float(T), negM=float(negM),
                               B=B, TM=TM, partner_slab=partner_slab)

    est = _vmem_estimate(B, D, TM, itemsize)
    cp_kwargs = dict(dimension_semantics=("parallel",))
    if est > 24 * 1024 * 1024:
        # Clamp to the device's real VMEM (64 MiB on v7x, 128 MiB v5e/v6e).
        cp_kwargs["vmem_limit_bytes"] = int(
            min(est + (8 << 20), vmem_cap - (8 << 20)))

    cost = pl.CostEstimate(
        flops=2 * B * B * D,
        transcendentals=2 * B * B,
        bytes_accessed=B * D * itemsize + B * 4,   # x DMA'd once + output
    )

    def _call(single_buffer_x):
        spec_kwargs = {}
        if single_buffer_x:
            # Constant block index => second pipeline buffer is pure waste.
            spec_kwargs["pipeline_mode"] = pl.Buffered(1)
        return pl.pallas_call(
            kernel,
            out_shape=jax.ShapeDtypeStruct((B, 1), jnp.float32),
            grid_spec=pltpu.PrefetchScalarGridSpec(
                num_scalar_prefetch=0,
                grid=(num_tiles,),
                in_specs=[pl.BlockSpec((B, D), lambda i: (0, 0),
                                       **spec_kwargs)],
                out_specs=pl.BlockSpec((TM, 1), lambda i: (i, 0)),
            ),
            compiler_params=pltpu.CompilerParams(**cp_kwargs),
            cost_estimate=cost,
        )(x_in)

    global _SINGLE_BUFFER_OK
    if _SINGLE_BUFFER_OK is None:
        try:
            per_row = _call(True)
            _SINGLE_BUFFER_OK = True
        except Exception:
            _SINGLE_BUFFER_OK = False
            per_row = _call(False)
    else:
        per_row = _call(_SINGLE_BUFFER_OK)

    return -jnp.sum(per_row) / B


def _criterion_reference(x, T=0.07, negM=1.0):
    """Plain-JAX reference mirroring the PyTorch forward (f32)."""
    B = x.shape[0]
    xr = jnp.concatenate([x[B // 2:], x[:B // 2]], axis=0)
    pos = jnp.exp(jnp.sum(x * xr, axis=1) / T)
    all_prob = jnp.exp(x @ x.T / T) * (1.0 - jnp.eye(B, dtype=x.dtype))
    if negM == 1.0:
        all_div = jnp.sum(all_prob, axis=1)
    else:
        all_div = (jnp.sum(all_prob, axis=1) - pos) * negM + pos
    lnPmt = pos / all_div
    lnPon = jnp.sum(jnp.log(1.0 - all_prob / all_div[:, None]), axis=1)
    lnPon = lnPon - jnp.log(1.0 - lnPmt)
    lnPmtsum = jnp.sum(jnp.log(lnPmt))
    lnPonsum = jnp.sum(lnPon) * negM
    return -(lnPmtsum + lnPonsum) / B


if __name__ == "__main__":
    # Criterion.__init__(negM, T, batchSize, device): forward sees
    # B = 2 * batchSize rows of D-dim (L2-normalized upstream) embeddings.
    init_batch = 16
    B = 2 * init_batch          # 32 rows
    D = 128                     # lane-dense embedding dim

    key = jax.random.PRNGKey(0)
    x = jax.random.normal(key, (B, D), dtype=jnp.float32)
    x = x / jnp.linalg.norm(x, axis=1, keepdims=True)   # Normalize(2)

    # (T, negM) pairs with a guaranteed-finite loss (with negM < 1 and a very
    # sharp T the original formulation can take log of a negative number —
    # a property of the loss itself, not of the kernel).
    configs = [(0.07, 1.0),     # standard temperature, negM == 1 branch
               (2.0, 0.5)]      # general negM branch
    for T, negM in configs:
        ref = _criterion_reference(x, T=T, negM=negM)
        assert bool(jnp.isfinite(ref)), (T, negM, ref)

        # Bit-accurate path (f32 MXU), default tiling: tight tolerance.
        loss = jax.block_until_ready(
            criterion_forward(x, T=T, negM=negM, mxu_dtype=jnp.float32))
        assert bool(jnp.allclose(loss, ref, rtol=2e-4, atol=1e-3)), \
            ("f32", T, negM, loss, ref)

        # f32, multi-tile with contiguous partner-row slab: tight tolerance.
        loss = jax.block_until_ready(
            criterion_forward(x, T=T, negM=negM, mxu_dtype=jnp.float32,
                              row_tile=8))
        assert bool(jnp.allclose(loss, ref, rtol=2e-4, atol=1e-3)), \
            ("f32/tiled", T, negM, loss, ref)

        # Default fast path: bf16 MXU operands, f32 accumulation.
        loss = jax.block_until_ready(criterion_forward(x, T=T, negM=negM))
        assert bool(jnp.allclose(loss, ref, rtol=2e-2, atol=2e-2)), \
            ("bf16", T, negM, loss, ref)

    print("KERNEL_OK")
</pallas_src>

<mosaic_0001>
module attributes {stable_mosaic.version = 11 : i64} {
  func.func @_criterion_kernel(%arg0: i32, %arg1: memref<32x128xf32, #tpu.memory_space<vmem>>, %arg2: memref<32x1xf32, #tpu.memory_space<vmem>>) attributes {dimension_semantics = [#tpu.dimension_semantics<parallel>], iteration_bounds = array<i64: 1>, scalar_prefetch = 0 : i64, scratch_operands = 0 : i64, tpu.core_type = #tpu.core_type<tc>, window_params = [{pipeline_mode = #tpu.pipeline_mode<synchronous>, transform_indices = @transform_0, window_bounds = array<i64: 32, 128>}, {transform_indices = @transform_1, window_bounds = array<i64: 32, 1>}]} {
    %c32_i32 = arith.constant 32 : i32
    %0 = arith.muli %arg0, %c32_i32 : i32
    %1 = tpu.assume_multiple %0, 32 : i32
    %2 = arith.index_cast %1 : i32 to index
    %c0 = arith.constant 0 : index
    %3 = vector.load %arg1[%2, %c0] : memref<32x128xf32, #tpu.memory_space<vmem>>, vector<32x128xf32>
    %c0_0 = arith.constant 0 : index
    %c0_1 = arith.constant 0 : index
    %4 = vector.load %arg1[%c0_0, %c0_1] : memref<32x128xf32, #tpu.memory_space<vmem>>, vector<32x128xf32>
    %cst = arith.constant dense<0.000000e+00> : vector<32x32xf32>
    %5 = tpu.matmul %3, %4, %cst {dimension_numbers = #tpu.dot_dimension_numbers<[1], [1], [0], [0], [0, 0, 1, 0], [], []>} : vector<32x128xf32>, vector<32x128xf32>, vector<32x32xf32> -> vector<32x32xf32>
    %cst_2 = arith.constant 14.2857141 : f32
    %6 = vector.broadcast %cst_2 : f32 to vector<32x32xf32>
    %7 = arith.mulf %5, %6 : vector<32x32xf32>
    %cst_3 = arith.constant dense<0xFF800000> : vector<32xf32>
    %8 = vector.multi_reduction <maximumf>, %7, %cst_3 [1] : vector<32x32xf32> to vector<32xf32>
    %9 = vector.shape_cast %8 : vector<32xf32> to vector<32x1xf32>
    %10 = vector.broadcast %9 : vector<32x1xf32> to vector<32x32xf32>
    %11 = arith.subf %7, %10 : vector<32x32xf32>
    %12 = tpu.iota {dimensions = array<i32: 1>} : vector<32x32xi32>
    %13 = tpu.iota {dimensions = array<i32: 0>} : vector<32x1xi32>
    %14 = vector.broadcast %0 : i32 to vector<32x1xi32>
    %15 = arith.addi %13, %14 : vector<32x1xi32>
    %16 = vector.broadcast %15 : vector<32x1xi32> to vector<32x32xi32>
    %17 = arith.cmpi eq, %12, %16 : vector<32x32xi32>
    %18 = math.exp %11 : vector<32x32xf32>
    %cst_4 = arith.constant 0.000000e+00 : f32
    %19 = vector.broadcast %cst_4 : f32 to vector<32x32xf32>
    %20 = arith.select %17, %19, %18 : vector<32x32xi1>, vector<32x32xf32>
    %cst_5 = arith.constant dense<0.000000e+00> : vector<32xf32>
    %21 = vector.multi_reduction <add>, %20, %cst_5 [1] : vector<32x32xf32> to vector<32xf32>
    %22 = vector.shape_cast %21 : vector<32xf32> to vector<32x1xf32>
    %c16_i32 = arith.constant 16 : i32
    %23 = vector.broadcast %c16_i32 : i32 to vector<32x1xi32>
    %24 = arith.addi %15, %23 : vector<32x1xi32>
    %c32_i32_6 = arith.constant 32 : i32
    %25 = vector.broadcast %c32_i32_6 : i32 to vector<32x1xi32>
    %26 = arith.cmpi sge, %24, %25 : vector<32x1xi32>
    %c32_i32_7 = arith.constant 32 : i32
    %27 = vector.broadcast %c32_i32_7 : i32 to vector<32x1xi32>
    %28 = arith.subi %24, %27 : vector<32x1xi32>
    %29 = arith.select %26, %28, %24 : vector<32x1xi1>, vector<32x1xi32>
    %30 = vector.broadcast %29 : vector<32x1xi32> to vector<32x32xi32>
    %31 = arith.cmpi eq, %12, %30 : vector<32x32xi32>
    %cst_8 = arith.constant 0.000000e+00 : f32
    %32 = vector.broadcast %cst_8 : f32 to vector<32x32xf32>
    %33 = arith.select %31, %20, %32 : vector<32x32xi1>, vector<32x32xf32>
    %cst_9 = arith.constant dense<0.000000e+00> : vector<32xf32>
    %34 = vector.multi_reduction <add>, %33, %cst_9 [1] : vector<32x32xf32> to vector<32xf32>
    %35 = vector.shape_cast %34 : vector<32xf32> to vector<32x1xf32>
    %36 = tpu.reciprocal %22 : vector<32x1xf32> -> vector<32x1xf32>
    %37 = arith.mulf %35, %36 : vector<32x1xf32>
    %38 = vector.broadcast %36 : vector<32x1xf32> to vector<32x32xf32>
    %39 = arith.mulf %20, %38 : vector<32x32xf32>
    %cst_10 = arith.constant 1.000000e+00 : f32
    %40 = vector.broadcast %cst_10 : f32 to vector<32x32xf32>
    %41 = arith.subf %40, %39 : vector<32x32xf32>
    %42 = math.log %41 : vector<32x32xf32>
    %cst_11 = arith.constant dense<0.000000e+00> : vector<32xf32>
    %43 = vector.multi_reduction <add>, %42, %cst_11 [1] : vector<32x32xf32> to vector<32xf32>
    %44 = vector.shape_cast %43 : vector<32xf32> to vector<32x1xf32>
    %cst_12 = arith.constant 1.000000e+00 : f32
    %45 = vector.broadcast %cst_12 : f32 to vector<32x1xf32>
    %46 = arith.subf %45, %37 : vector<32x1xf32>
    %47 = math.log %46 : vector<32x1xf32>
    %48 = arith.subf %44, %47 : vector<32x1xf32>
    %49 = math.log %37 : vector<32x1xf32>
    %cst_13 = arith.constant 1.000000e+00 : f32
    %50 = vector.broadcast %cst_13 : f32 to vector<32x1xf32>
    %51 = arith.mulf %50, %48 : vector<32x1xf32>
    %52 = arith.addf %49, %51 : vector<32x1xf32>
    %c0_14 = arith.constant 0 : index
    %c0_15 = arith.constant 0 : index
    %53 = vector.load %arg2[%c0_14, %c0_15] : memref<32x1xf32, #tpu.memory_space<vmem>>, vector<32x1xf32>
    tpu.vector_store %arg2[%c0_14, %c0_15], %52 {strides = array<i32>} : memref<32x1xf32, #tpu.memory_space<vmem>>, vector<32x1xf32>,
    return
  }
  func.func @transform_0(%arg0: i32) -> (i32, i32) {
    %c0_i32 = arith.constant 0 : i32
    %c0_i32_0 = arith.constant 0 : i32
    %c0_i32_1 = arith.constant 0 : i32
    return %c0_i32, %c0_i32_0 : i32, i32
  }
  func.func @transform_1(%arg0: i32) -> (i32, i32) {
    %c0_i32 = arith.constant 0 : i32
    %c0_i32_0 = arith.constant 0 : i32
    return %arg0, %c0_i32 : i32, i32
  }
}

module attributes {stable_mosaic.version = 11 : i64} {
  func.func @_criterion_kernel(%arg0: i32, %arg1: memref<32x128xf32, #tpu.memory_space<vmem>>, %arg2: memref<32x1xf32, #tpu.memory_space<vmem>>) attributes {dimension_semantics = [#tpu.dimension_semantics<parallel>], iteration_bounds = array<i64: 1>, scalar_prefetch = 0 : i64, scratch_operands = 0 : i64, tpu.core_type = #tpu.core_type<tc>, window_params = [{pipeline_mode = #tpu.pipeline_mode<synchronous>, transform_indices = @transform_0, window_bounds = array<i64: 32, 128>}, {transform_indices = @transform_1, window_bounds = array<i64: 32, 1>}]} {
    %c32_i32 = arith.constant 32 : i32
    %0 = arith.muli %arg0, %c32_i32 : i32
    %1 = tpu.assume_multiple %0, 32 : i32
    %2 = arith.index_cast %1 : i32 to index
    %c0 = arith.constant 0 : index
    %3 = vector.load %arg1[%2, %c0] : memref<32x128xf32, #tpu.memory_space<vmem>>, vector<32x128xf32>
    %c0_0 = arith.constant 0 : index
    %c0_1 = arith.constant 0 : index
    %4 = vector.load %arg1[%c0_0, %c0_1] : memref<32x128xf32, #tpu.memory_space<vmem>>, vector<32x128xf32>
    %cst = arith.constant dense<0.000000e+00> : vector<32x32xf32>
    %5 = tpu.matmul %3, %4, %cst {dimension_numbers = #tpu.dot_dimension_numbers<[1], [1], [0], [0], [0, 0, 1, 0], [], []>} : vector<32x128xf32>, vector<32x128xf32>, vector<32x32xf32> -> vector<32x32xf32>
    %cst_2 = arith.constant 14.2857141 : f32
    %6 = vector.broadcast %cst_2 : f32 to vector<32x32xf32>
    %7 = arith.mulf %5, %6 : vector<32x32xf32>
    %cst_3 = arith.constant dense<0xFF800000> : vector<32xf32>
    %8 = vector.multi_reduction <maximumf>, %7, %cst_3 [1] : vector<32x32xf32> to vector<32xf32>
    %9 = vector.shape_cast %8 : vector<32xf32> to vector<32x1xf32>
    %10 = vector.broadcast %9 : vector<32x1xf32> to vector<32x32xf32>
    %11 = arith.subf %7, %10 : vector<32x32xf32>
    %12 = tpu.iota {dimensions = array<i32: 1>} : vector<32x32xi32>
    %13 = tpu.iota {dimensions = array<i32: 0>} : vector<32x1xi32>
    %14 = vector.broadcast %0 : i32 to vector<32x1xi32>
    %15 = arith.addi %13, %14 : vector<32x1xi32>
    %16 = vector.broadcast %15 : vector<32x1xi32> to vector<32x32xi32>
    %17 = arith.cmpi eq, %12, %16 : vector<32x32xi32>
    %18 = math.exp %11 : vector<32x32xf32>
    %cst_4 = arith.constant 0.000000e+00 : f32
    %19 = vector.broadcast %cst_4 : f32 to vector<32x32xf32>
    %20 = arith.select %17, %19, %18 : vector<32x32xi1>, vector<32x32xf32>
    %cst_5 = arith.constant dense<0.000000e+00> : vector<32xf32>
    %21 = vector.multi_reduction <add>, %20, %cst_5 [1] : vector<32x32xf32> to vector<32xf32>
    %22 = vector.shape_cast %21 : vector<32xf32> to vector<32x1xf32>
    %c16_i32 = arith.constant 16 : i32
    %23 = vector.broadcast %c16_i32 : i32 to vector<32x1xi32>
    %24 = arith.addi %15, %23 : vector<32x1xi32>
    %c32_i32_6 = arith.constant 32 : i32
    %25 = vector.broadcast %c32_i32_6 : i32 to vector<32x1xi32>
    %26 = arith.cmpi sge, %24, %25 : vector<32x1xi32>
    %c32_i32_7 = arith.constant 32 : i32
    %27 = vector.broadcast %c32_i32_7 : i32 to vector<32x1xi32>
    %28 = arith.subi %24, %27 : vector<32x1xi32>
    %29 = arith.select %26, %28, %24 : vector<32x1xi1>, vector<32x1xi32>
    %30 = vector.broadcast %29 : vector<32x1xi32> to vector<32x32xi32>
    %31 = arith.cmpi eq, %12, %30 : vector<32x32xi32>
    %cst_8 = arith.constant 0.000000e+00 : f32
    %32 = vector.broadcast %cst_8 : f32 to vector<32x32xf32>
    %33 = arith.select %31, %20, %32 : vector<32x32xi1>, vector<32x32xf32>
    %cst_9 = arith.constant dense<0.000000e+00> : vector<32xf32>
    %34 = vector.multi_reduction <add>, %33, %cst_9 [1] : vector<32x32xf32> to vector<32xf32>
    %35 = vector.shape_cast %34 : vector<32xf32> to vector<32x1xf32>
    %36 = tpu.reciprocal %22 : vector<32x1xf32> -> vector<32x1xf32>
    %37 = arith.mulf %35, %36 : vector<32x1xf32>
    %38 = vector.broadcast %36 : vector<32x1xf32> to vector<32x32xf32>
    %39 = arith.mulf %20, %38 : vector<32x32xf32>
    %cst_10 = arith.constant 1.000000e+00 : f32
    %40 = vector.broadcast %cst_10 : f32 to vector<32x32xf32>
    %41 = arith.subf %40, %39 : vector<32x32xf32>
    %42 = math.log %41 : vector<32x32xf32>
    %cst_11 = arith.constant dense<0.000000e+00> : vector<32xf32>
    %43 = vector.multi_reduction <add>, %42, %cst_11 [1] : vector<32x32xf32> to vector<32xf32>
    %44 = vector.shape_cast %43 : vector<32xf32> to vector<32x1xf32>
    %cst_12 = arith.constant 1.000000e+00 : f32
    %45 = vector.broadcast %cst_12 : f32 to vector<32x1xf32>
    %46 = arith.subf %45, %37 : vector<32x1xf32>
    %47 = math.log %46 : vector<32x1xf32>
    %48 = arith.subf %44, %47 : vector<32x1xf32>
    %49 = math.log %37 : vector<32x1xf32>
    %cst_13 = arith.constant 1.000000e+00 : f32
    %50 = vector.broadcast %cst_13 : f32 to vector<32x1xf32>
    %51 = arith.mulf %50, %48 : vector<32x1xf32>
    %52 = arith.addf %49, %51 : vector<32x1xf32>
    %c0_14 = arith.constant 0 : index
    %c0_15 = arith.constant 0 : index
    %53 = vector.load %arg2[%c0_14, %c0_15] : memref<32x1xf32, #tpu.memory_space<vmem>>, vector<32x1xf32>
    tpu.vector_store %arg2[%c0_14, %c0_15], %52 {strides = array<i32>} : memref<32x1xf32, #tpu.memory_space<vmem>>, vector<32x1xf32>,
    return
  }
  func.func @transform_0(%arg0: i32) -> (i32, i32) {
    %c0_i32 = arith.constant 0 : i32
    %c0_i32_0 = arith.constant 0 : i32
    %c0_i32_1 = arith.constant 0 : i32
    return %c0_i32, %c0_i32_0 : i32, i32
  }
  func.func @transform_1(%arg0: i32) -> (i32, i32) {
    %c0_i32 = arith.constant 0 : i32
    %c0_i32_0 = arith.constant 0 : i32
    return %arg0, %c0_i32 : i32, i32
  }
}

</mosaic_0001>

<llo_original>
// kernel: tpu_custom_call.1
$region0: #{tpu_custom_call.1}
  #allocation0 [shape = 'u32[]', space=smem, size = 0x4, offset = 0x4, fixed_abs, tag = 'smem constant byte address 0x4 - core index']
  #allocation1 [shape = 'u32[144,128]{1,0:T(1,128)}', space=vmem, size = 0x12000, scoped, tag = 'internal scratch']
  %s0 = inlined_call_operand.hbm [shape: f32[32,128], index: 0, kind: input, shape index: {}]
  %s1 = inlined_call_operand.vmem [shape: f32[32,1], index: 1, kind: output, shape index: {}]
  %s2 = sld [smem:[#allocation0]]
  $region18: #{tpu_custom_call.1} parent=0
    _
  %s4 = ssub.s32 1, %s2
  %s5 = scalar_select 0, %s4, %s2
  $region1: #{tpu_custom_call.1} parent=0
    #allocation2 [shape = 'u8[16384]{0}', space=vmem, size = 0x4000, scoped, tag = 'input window, operand 0, single buffered']
    #allocation3 [shape = 's32[1]{0}', space=sflag, size = 0x4, scoped, tag = 'scoped memory for tpu_custom_call.1']
    %6 = vsyncpa [#allocation3], 0
    // Predicated region
    $region2: #{tpu_custom_call.1} parent=1 // pred_check
      _
    $region3: #{tpu_custom_call.1} parent=1 // pred_check_branch
      %8 = sbr.rel (0) target = $region5
    $region4: #{tpu_custom_call.1} parent=1 // pred_region
      %s10 = ssub.s32 512, 512
      %11 = vsyncadd [#allocation3], %s10
      %s12 = sshll.u32 [#allocation2], 4
      %s13 = int_to_ptr.vmem [resolvable:$true] %s12
      %18 = dma.hbm_to_vmem [thread:$0]  %s0, 512, %s13, [#allocation3], 128, 128, 8
    $region5: #{tpu_custom_call.1} parent=1 // pred_fallthru
      _
    // Predicated region
    $region6: #{tpu_custom_call.1} parent=1 // pred_check
      _
    $region7: #{tpu_custom_call.1} parent=1 // pred_check_branch
      %20 = sbr.rel (0) target = $region9
    $region8: #{tpu_custom_call.1} parent=1 // pred_region
      %21 = dma.done [#allocation3], 512
    $region9: #{tpu_custom_call.1} parent=1 // pred_fallthru
      _
    %s22 = smul.u32 0, 32
    %s23 = scalar_lea.vmem [#allocation2], %s22
    %v24 = vld [vmem:[%s23] sm:$0xff]
    %v25 = vld [vmem:[%s23 + $0x8] sm:$0xff]
    %v26 = vld [vmem:[%s23 + $0x10] sm:$0xff]
    %v27 = vld [vmem:[%s23 + $0x18] sm:$0xff]
    %v28 = vld [vmem:[#allocation2] sm:$0xff]
    %v29 = vld [vmem:[#allocation2 + $0x8] sm:$0xff]
    %v30 = vld [vmem:[#allocation2 + $0x10] sm:$0xff]
    %v31 = vld [vmem:[#allocation2 + $0x18] sm:$0xff]
    %32 = vmatprep.subr.mxu0 0.0
    %33 = vmatpush1.xpose.msra.mxu0 0.0
    %34 = vmatprep.subr.mxu0 0.0
    %35 = vmatpush1.xpose.msra.mxu0 0.0
    %36 = vmatprep.subr.mxu0 0.0
    %37 = vmatpush1.xpose.msra.mxu0 0.0
    %38 = vmatprep.subr.mxu0 0.0
    %39 = vmatpush1.xpose.msra.mxu0 0.0
    %40 = vmatprep.subr.mxu0 0.0
    %41 = vmatpush1.xpose.msra.mxu0 0.0
    %42 = vmatprep.subr.mxu0 0.0
    %43 = vmatpush1.xpose.msra.mxu0 0.0
    %44 = vmatprep.subr.mxu0 0.0
    %45 = vmatpush1.xpose.msra.mxu0 0.0
    %46 = vmatprep.subr.mxu0 0.0
    %47 = vmatpush1.xpose.msra.mxu0 0.0
    %48 = vmatprep.subr.mxu0 0.0
    %49 = vmatpush1.xpose.msra.mxu0 0.0
    %50 = vmatprep.subr.mxu0 0.0
    %51 = vmatpush1.xpose.msra.mxu0 0.0
    %52 = vmatprep.subr.mxu0 0.0
    %53 = vmatpush1.xpose.msra.mxu0 0.0
    %54 = vmatprep.subr.mxu0 0.0
    %55 = vmatpush1.xpose.msra.mxu0 0.0
    %56 = vmatprep.subr.mxu0 0.0
    %57 = vmatpush1.xpose.msra.mxu0 %v31
    %58 = vmatprep.subr.mxu0 0.0
    %59 = vmatpush1.xpose.msra.mxu0 %v30
    %60 = vmatprep.subr.mxu0 0.0
    %61 = vmatpush1.xpose.msra.mxu0 %v29
    %62 = vmatprep.subr.mxu0 0.0
    %63 = vmatpush1.xpose.msra.mxu0 %v28
    %64 = vmatprep.subr.mxu0 0.0
    %65 = vmatpush2.xpose.msra.mxu0 0.0
    %66 = vmatprep.subr.mxu0 0.0
    %67 = vmatpush2.xpose.msra.mxu0 0.0
    %68 = vmatprep.subr.mxu0 0.0
    %69 = vmatpush2.xpose.msra.mxu0 0.0
    %70 = vmatprep.subr.mxu0 0.0
    %71 = vmatpush2.xpose.msra.mxu0 0.0
    %72 = vmatprep.subr.mxu0 0.0
    %73 = vmatpush2.xpose.msra.mxu0 0.0
    %74 = vmatprep.subr.mxu0 0.0
    %75 = vmatpush2.xpose.msra.mxu0 0.0
    %76 = vmatprep.subr.mxu0 0.0
    %77 = vmatpush2.xpose.msra.mxu0 0.0
    %78 = vmatprep.subr.mxu0 0.0
    %79 = vmatpush2.xpose.msra.mxu0 0.0
    %80 = vmatprep.subr.mxu0 0.0
    %81 = vmatpush2.xpose.msra.mxu0 0.0
    %82 = vmatprep.subr.mxu0 0.0
    %83 = vmatpush2.xpose.msra.mxu0 0.0
    %84 = vmatprep.subr.mxu0 0.0
    %85 = vmatpush2.xpose.msra.mxu0 0.0
    %86 = vmatprep.subr.mxu0 0.0
    %87 = vmatpush2.xpose.msra.mxu0 0.0
    %88 = vmatprep.subr.mxu0 0.0
    %89 = vmatpush2.xpose.msra.mxu0 0.0
    %90 = vmatprep.subr.mxu0 0.0
    %91 = vmatpush2.xpose.msra.mxu0 0.0
    %92 = vmatprep.subr.mxu0 0.0
    %93 = vmatpush2.xpose.msra.mxu0 0.0
    %94 = vmatprep.subr.mxu0 0.0
    %95 = vmatpush2.xpose.msra.mxu0 0.0
    %96 = vmatprep.mubr.f32.mxu0 0.0
    %97 = vmatmul.mubr.f32.gmra.mxu0 %v24
    %v98 = vpop.f32.mrf.mxu0
    %v99 = vadd.f32 0.0, %v98
    %v100 = vpop.f32.mrf.mxu0
    %101 = vmatprep.mubr.f32.mxu0 0.0
    %102 = vmatmul.mubr.f32.gmra.mxu0 %v25
    %v103 = vpop.f32.mrf.mxu0
    %v104 = vadd.f32 0.0, %v103
    %v105 = vpop.f32.mrf.mxu0
    %106 = vmatprep.mubr.f32.mxu0 0.0
    %107 = vmatmul.mubr.f32.gmra.mxu0 %v26
    %v108 = vpop.f32.mrf.mxu0
    %v109 = vadd.f32 0.0, %v108
    %v110 = vpop.f32.mrf.mxu0
    %111 = vmatprep.mubr.f32.mxu0 0.0
    %112 = vmatmul.mubr.f32.gmra.mxu0 %v27
    %v113 = vpop.f32.mrf.mxu0
    %v114 = vadd.f32 0.0, %v113
    %v115 = vpop.f32.mrf.mxu0
    %116 = vdwg.mxu0
    %v117 = vmul.f32 %v99, 14.285714
    %v118 = vmul.f32 %v104, 14.285714
    %v119 = vmul.f32 %v109, 14.285714
    %v120 = vmul.f32 %v114, 14.285714
    %vm121 = vcmask 261120
    %v122 = vsel %vm121, %v117, -inf
    %123 = vmax.xlane.f32.xlu0 %v122
    %v124 = vpop.xlane.xlu0 %123
    %v125 = vsel %vm121, %v118, -inf
    %126 = vmax.xlane.f32.xlu0 %v125
    %v127 = vpop.xlane.xlu0 %126
    %v128 = vsel %vm121, %v119, -inf
    %129 = vmax.xlane.f32.xlu0 %v128
    %v130 = vpop.xlane.xlu0 %129
    %v131 = vsel %vm121, %v120, -inf
    %132 = vmax.xlane.f32.xlu0 %v131
    %v133 = vpop.xlane.xlu0 %132
    %v134 = vsub.f32 %v117, %v124
    %v135 = vsub.f32 %v118, %v127
    %v136 = vsub.f32 %v119, %v130
    %v137 = vsub.f32 %v120, %v133
    %v138 = vlaneseq
    %v139 = vand.u32 %v138, 127
    %v140 = vlaneseq
    %v141 = vshrl.u32 %v140, 7
    %v142 = vadd.s32 %v141, 8
    %v143 = vadd.s32 %v141, 16
    %v144 = vadd.s32 %v141, 24
    %v145 = vstv %s22
    %v146 = vadd.s32 %v141, %v145
    %v147 = vadd.s32 %v142, %v145
    %v148 = vadd.s32 %v143, %v145
    %v149 = vadd.s32 %v144, %v145
    %vm150 = vcmp.eq.s32.totalorder %v139, %v146
    %vm151 = vcmp.eq.s32.totalorder %v139, %v147
    %vm152 = vcmp.eq.s32.totalorder %v139, %v148
    %vm153 = vcmp.eq.s32.totalorder %v139, %v149
    %v154 = vmul.f32 %v134, 1.442695
    %v155 = vpow.pop %v154
    %v156 = vmul.f32 %v135, 1.442695
    %v157 = vpow.pop %v156
    %v158 = vmul.f32 %v136, 1.442695
    %v159 = vpow.pop %v158
    %v160 = vmul.f32 %v137, 1.442695
    %v161 = vpow.pop %v160
    %v162 = vsel %vm150, 0.0, %v155
    %v163 = vsel %vm151, 0.0, %v157
    %v164 = vsel %vm152, 0.0, %v159
    %v165 = vsel %vm153, 0.0, %v161
    %v166 = vsel %vm121, %v162, 0.0
    %167 = vadd.xlane.f32.xlu0 %v166
    %v168 = vpop.xlane.xlu0 %167
    %v169 = vsel %vm121, %v163, 0.0
    %170 = vadd.xlane.f32.xlu0 %v169
    %v171 = vpop.xlane.xlu0 %170
    %v172 = vsel %vm121, %v164, 0.0
    %173 = vadd.xlane.f32.xlu0 %v172
    %v174 = vpop.xlane.xlu0 %173
    %v175 = vsel %vm121, %v165, 0.0
    %176 = vadd.xlane.f32.xlu0 %v175
    %v177 = vpop.xlane.xlu0 %176
    %v178 = vadd.s32 %v146, 16
    %v179 = vadd.s32 %v147, 16
    %v180 = vadd.s32 %v148, 16
    %v181 = vadd.s32 %v149, 16
    %vm182 = vcmp.ge.s32.totalorder %v178, 32
    %vm183 = vcmp.ge.s32.totalorder %v179, 32
    %vm184 = vcmp.ge.s32.totalorder %v180, 32
    %vm185 = vcmp.ge.s32.totalorder %v181, 32
    %v186 = vsub.s32 %v178, 32
    %v187 = vsub.s32 %v179, 32
    %v188 = vsub.s32 %v180, 32
    %v189 = vsub.s32 %v181, 32
    %v190 = vsel %vm182, %v186, %v178
    %v191 = vsel %vm183, %v187, %v179
    %v192 = vsel %vm184, %v188, %v180
    %v193 = vsel %vm185, %v189, %v181
    %vm194 = vcmp.eq.s32.totalorder %v139, %v190
    %vm195 = vcmp.eq.s32.totalorder %v139, %v191
    %vm196 = vcmp.eq.s32.totalorder %v139, %v192
    %vm197 = vcmp.eq.s32.totalorder %v139, %v193
    %v198 = vsel %vm194, %v162, 0.0
    %v199 = vsel %vm195, %v163, 0.0
    %v200 = vsel %vm196, %v164, 0.0
    %v201 = vsel %vm197, %v165, 0.0
    %v202 = vsel %vm121, %v198, 0.0
    %203 = vadd.xlane.f32.xlu0 %v202
    %v204 = vpop.xlane.xlu0 %203
    %v205 = vsel %vm121, %v199, 0.0
    %206 = vadd.xlane.f32.xlu0 %v205
    %v207 = vpop.xlane.xlu0 %206
    %v208 = vsel %vm121, %v200, 0.0
    %209 = vadd.xlane.f32.xlu0 %v208
    %v210 = vpop.xlane.xlu0 %209
    %v211 = vsel %vm121, %v201, 0.0
    %212 = vadd.xlane.f32.xlu0 %v211
    %v213 = vpop.xlane.xlu0 %212
    %v214 = vrcp.pop %v168
    %v215 = vrcp.pop %v171
    %v216 = vrcp.pop %v174
    %v217 = vrcp.pop %v177
    %v218 = vmul.f32 %v204, %v214
    %v219 = vmul.f32 %v207, %v215
    %v220 = vmul.f32 %v210, %v216
    %v221 = vmul.f32 %v213, %v217
    %v222 = vmul.f32 %v162, %v214
    %v223 = vmul.f32 %v163, %v215
    %v224 = vmul.f32 %v164, %v216
    %v225 = vmul.f32 %v165, %v217
    %v226 = vsub.f32 1.0, %v222
    %v227 = vsub.f32 1.0, %v223
    %v228 = vsub.f32 1.0, %v224
    %v229 = vsub.f32 1.0, %v225
    %v230 = vlog2.pop %v226
    %v231 = vmul.f32 %v230, 0.6931472
    %v232 = vlog2.pop %v227
    %v233 = vmul.f32 %v232, 0.6931472
    %v234 = vlog2.pop %v228
    %v235 = vmul.f32 %v234, 0.6931472
    %v236 = vlog2.pop %v229
    %v237 = vmul.f32 %v236, 0.6931472
    %v238 = vsel %vm121, %v231, 0.0
    %239 = vadd.xlane.f32.xlu0 %v238
    %v240 = vpop.xlane.xlu0 %239
    %v241 = vsel %vm121, %v233, 0.0
    %242 = vadd.xlane.f32.xlu0 %v241
    %v243 = vpop.xlane.xlu0 %242
    %v244 = vsel %vm121, %v235, 0.0
    %245 = vadd.xlane.f32.xlu0 %v244
    %v246 = vpop.xlane.xlu0 %245
    %v247 = vsel %vm121, %v237, 0.0
    %248 = vadd.xlane.f32.xlu0 %v247
    %v249 = vpop.xlane.xlu0 %248
    %v250 = vsub.f32 1.0, %v218
    %v251 = vsub.f32 1.0, %v219
    %v252 = vsub.f32 1.0, %v220
    %v253 = vsub.f32 1.0, %v221
    %v254 = vlog2.pop %v250
    %v255 = vmul.f32 %v254, 0.6931472
    %v256 = vlog2.pop %v251
    %v257 = vmul.f32 %v256, 0.6931472
    %v258 = vlog2.pop %v252
    %v259 = vmul.f32 %v258, 0.6931472
    %v260 = vlog2.pop %v253
    %v261 = vmul.f32 %v260, 0.6931472
    %v262 = vsub.f32 %v240, %v255
    %v263 = vsub.f32 %v243, %v257
    %v264 = vsub.f32 %v246, %v259
    %v265 = vsub.f32 %v249, %v261
    %v266 = vlog2.pop %v218
    %v267 = vmul.f32 %v266, 0.6931472
    %v268 = vlog2.pop %v219
    %v269 = vmul.f32 %v268, 0.6931472
    %v270 = vlog2.pop %v220
    %v271 = vmul.f32 %v270, 0.6931472
    %v272 = vlog2.pop %v221
    %v273 = vmul.f32 %v272, 0.6931472
    %v274 = vadd.f32 %v267, %v262
    %v275 = vadd.f32 %v269, %v263
    %v276 = vadd.f32 %v271, %v264
    %v277 = vadd.f32 %v273, %v265
    %vm278 = vcmask 7168
    %279 = vst.msk [vmem:[%s1] sm:$0xff] %vm278, %v274
    %280 = vst.msk [vmem:[%s1 + $0x8] sm:$0xff] %vm278, %v275
    %281 = vst.msk [vmem:[%s1 + $0x10] sm:$0xff] %vm278, %v276
    %282 = vst.msk [vmem:[%s1 + $0x18] sm:$0xff] %vm278, %v277
    // Predicated region
    $region10: #{tpu_custom_call.1} parent=1 // pred_check
      _
    $region11: #{tpu_custom_call.1} parent=1 // pred_check_branch
      %284 = sbr.rel (0) target = $region13
    $region12: #{tpu_custom_call.1} parent=1 // pred_region
      _
    $region13: #{tpu_custom_call.1} parent=1 // pred_fallthru
      _
    // Predicated region
    $region14: #{tpu_custom_call.1} parent=1 // pred_check
      _
    $region15: #{tpu_custom_call.1} parent=1 // pred_check_branch
      %286 = sbr.rel (0) target = $region17
    $region16: #{tpu_custom_call.1} parent=1 // pred_region
      _
    $region17: #{tpu_custom_call.1} parent=1 // pred_fallthru
      _
    %287 = vsyncpa [#allocation3], 1

// kernel: tpu_custom_call.1
$region0: #{tpu_custom_call.1}
  #allocation0 [shape = 'u32[]', space=smem, size = 0x4, offset = 0x4, fixed_abs, tag = 'smem constant byte address 0x4 - core index']
  #allocation1 [shape = 'u32[144,128]{1,0:T(1,128)}', space=vmem, size = 0x12000, scoped, tag = 'internal scratch']
  %s0 = inlined_call_operand.hbm [shape: f32[32,128], index: 0, kind: input, shape index: {}]
  %s1 = inlined_call_operand.vmem [shape: f32[32,1], index: 1, kind: output, shape index: {}]
  %s2 = sld [smem:[#allocation0]]
  $region18: #{tpu_custom_call.1} parent=0
    _
  %s4 = ssub.s32 1, %s2
  %s5 = scalar_select 0, %s4, %s2
  $region1: #{tpu_custom_call.1} parent=0
    #allocation2 [shape = 'u8[16384]{0}', space=vmem, size = 0x4000, scoped, tag = 'input window, operand 0, single buffered']
    #allocation3 [shape = 's32[1]{0}', space=sflag, size = 0x4, scoped, tag = 'scoped memory for tpu_custom_call.1']
    %6 = vsyncpa [#allocation3], 0
    // Predicated region
    $region2: #{tpu_custom_call.1} parent=1 // pred_check
      _
    $region3: #{tpu_custom_call.1} parent=1 // pred_check_branch
      %8 = sbr.rel (0) target = $region5
    $region4: #{tpu_custom_call.1} parent=1 // pred_region
      %s10 = ssub.s32 512, 512
      %11 = vsyncadd [#allocation3], %s10
      %s12 = sshll.u32 [#allocation2], 4
      %s13 = int_to_ptr.vmem [resolvable:$true] %s12
      %18 = dma.hbm_to_vmem [thread:$0]  %s0, 512, %s13, [#allocation3], 128, 128, 8
    $region5: #{tpu_custom_call.1} parent=1 // pred_fallthru
      _
    // Predicated region
    $region6: #{tpu_custom_call.1} parent=1 // pred_check
      _
    $region7: #{tpu_custom_call.1} parent=1 // pred_check_branch
      %20 = sbr.rel (0) target = $region9
    $region8: #{tpu_custom_call.1} parent=1 // pred_region
      %21 = dma.done [#allocation3], 512
    $region9: #{tpu_custom_call.1} parent=1 // pred_fallthru
      _
    %s22 = smul.u32 0, 32
    %s23 = scalar_lea.vmem [#allocation2], %s22
    %v24 = vld [vmem:[%s23] sm:$0xff]
    %v25 = vld [vmem:[%s23 + $0x8] sm:$0xff]
    %v26 = vld [vmem:[%s23 + $0x10] sm:$0xff]
    %v27 = vld [vmem:[%s23 + $0x18] sm:$0xff]
    %v28 = vld [vmem:[#allocation2] sm:$0xff]
    %v29 = vld [vmem:[#allocation2 + $0x8] sm:$0xff]
    %v30 = vld [vmem:[#allocation2 + $0x10] sm:$0xff]
    %v31 = vld [vmem:[#allocation2 + $0x18] sm:$0xff]
    %32 = vmatprep.subr.mxu0 0.0
    %33 = vmatpush1.xpose.msra.mxu0 0.0
    %34 = vmatprep.subr.mxu0 0.0
    %35 = vmatpush1.xpose.msra.mxu0 0.0
    %36 = vmatprep.subr.mxu0 0.0
    %37 = vmatpush1.xpose.msra.mxu0 0.0
    %38 = vmatprep.subr.mxu0 0.0
    %39 = vmatpush1.xpose.msra.mxu0 0.0
    %40 = vmatprep.subr.mxu0 0.0
    %41 = vmatpush1.xpose.msra.mxu0 0.0
    %42 = vmatprep.subr.mxu0 0.0
    %43 = vmatpush1.xpose.msra.mxu0 0.0
    %44 = vmatprep.subr.mxu0 0.0
    %45 = vmatpush1.xpose.msra.mxu0 0.0
    %46 = vmatprep.subr.mxu0 0.0
    %47 = vmatpush1.xpose.msra.mxu0 0.0
    %48 = vmatprep.subr.mxu0 0.0
    %49 = vmatpush1.xpose.msra.mxu0 0.0
    %50 = vmatprep.subr.mxu0 0.0
    %51 = vmatpush1.xpose.msra.mxu0 0.0
    %52 = vmatprep.subr.mxu0 0.0
    %53 = vmatpush1.xpose.msra.mxu0 0.0
    %54 = vmatprep.subr.mxu0 0.0
    %55 = vmatpush1.xpose.msra.mxu0 0.0
    %56 = vmatprep.subr.mxu0 0.0
    %57 = vmatpush1.xpose.msra.mxu0 %v31
    %58 = vmatprep.subr.mxu0 0.0
    %59 = vmatpush1.xpose.msra.mxu0 %v30
    %60 = vmatprep.subr.mxu0 0.0
    %61 = vmatpush1.xpose.msra.mxu0 %v29
    %62 = vmatprep.subr.mxu0 0.0
    %63 = vmatpush1.xpose.msra.mxu0 %v28
    %64 = vmatprep.subr.mxu0 0.0
    %65 = vmatpush2.xpose.msra.mxu0 0.0
    %66 = vmatprep.subr.mxu0 0.0
    %67 = vmatpush2.xpose.msra.mxu0 0.0
    %68 = vmatprep.subr.mxu0 0.0
    %69 = vmatpush2.xpose.msra.mxu0 0.0
    %70 = vmatprep.subr.mxu0 0.0
    %71 = vmatpush2.xpose.msra.mxu0 0.0
    %72 = vmatprep.subr.mxu0 0.0
    %73 = vmatpush2.xpose.msra.mxu0 0.0
    %74 = vmatprep.subr.mxu0 0.0
    %75 = vmatpush2.xpose.msra.mxu0 0.0
    %76 = vmatprep.subr.mxu0 0.0
    %77 = vmatpush2.xpose.msra.mxu0 0.0
    %78 = vmatprep.subr.mxu0 0.0
    %79 = vmatpush2.xpose.msra.mxu0 0.0
    %80 = vmatprep.subr.mxu0 0.0
    %81 = vmatpush2.xpose.msra.mxu0 0.0
    %82 = vmatprep.subr.mxu0 0.0
    %83 = vmatpush2.xpose.msra.mxu0 0.0
    %84 = vmatprep.subr.mxu0 0.0
    %85 = vmatpush2.xpose.msra.mxu0 0.0
    %86 = vmatprep.subr.mxu0 0.0
    %87 = vmatpush2.xpose.msra.mxu0 0.0
    %88 = vmatprep.subr.mxu0 0.0
    %89 = vmatpush2.xpose.msra.mxu0 0.0
    %90 = vmatprep.subr.mxu0 0.0
    %91 = vmatpush2.xpose.msra.mxu0 0.0
    %92 = vmatprep.subr.mxu0 0.0
    %93 = vmatpush2.xpose.msra.mxu0 0.0
    %94 = vmatprep.subr.mxu0 0.0
    %95 = vmatpush2.xpose.msra.mxu0 0.0
    %96 = vmatprep.mubr.f32.mxu0 0.0
    %97 = vmatmul.mubr.f32.gmra.mxu0 %v24
    %v98 = vpop.f32.mrf.mxu0
    %v99 = vadd.f32 0.0, %v98
    %v100 = vpop.f32.mrf.mxu0
    %101 = vmatprep.mubr.f32.mxu0 0.0
    %102 = vmatmul.mubr.f32.gmra.mxu0 %v25
    %v103 = vpop.f32.mrf.mxu0
    %v104 = vadd.f32 0.0, %v103
    %v105 = vpop.f32.mrf.mxu0
    %106 = vmatprep.mubr.f32.mxu0 0.0
    %107 = vmatmul.mubr.f32.gmra.mxu0 %v26
    %v108 = vpop.f32.mrf.mxu0
    %v109 = vadd.f32 0.0, %v108
    %v110 = vpop.f32.mrf.mxu0
    %111 = vmatprep.mubr.f32.mxu0 0.0
    %112 = vmatmul.mubr.f32.gmra.mxu0 %v27
    %v113 = vpop.f32.mrf.mxu0
    %v114 = vadd.f32 0.0, %v113
    %v115 = vpop.f32.mrf.mxu0
    %116 = vdwg.mxu0
    %v117 = vmul.f32 %v99, 14.285714
    %v118 = vmul.f32 %v104, 14.285714
    %v119 = vmul.f32 %v109, 14.285714
    %v120 = vmul.f32 %v114, 14.285714
    %vm121 = vcmask 261120
    %v122 = vsel %vm121, %v117, -inf
    %123 = vmax.xlane.f32.xlu0 %v122
    %v124 = vpop.xlane.xlu0 %123
    %v125 = vsel %vm121, %v118, -inf
    %126 = vmax.xlane.f32.xlu0 %v125
    %v127 = vpop.xlane.xlu0 %126
    %v128 = vsel %vm121, %v119, -inf
    %129 = vmax.xlane.f32.xlu0 %v128
    %v130 = vpop.xlane.xlu0 %129
    %v131 = vsel %vm121, %v120, -inf
    %132 = vmax.xlane.f32.xlu0 %v131
    %v133 = vpop.xlane.xlu0 %132
    %v134 = vsub.f32 %v117, %v124
    %v135 = vsub.f32 %v118, %v127
    %v136 = vsub.f32 %v119, %v130
    %v137 = vsub.f32 %v120, %v133
    %v138 = vlaneseq
    %v139 = vand.u32 %v138, 127
    %v140 = vlaneseq
    %v141 = vshrl.u32 %v140, 7
    %v142 = vadd.s32 %v141, 8
    %v143 = vadd.s32 %v141, 16
    %v144 = vadd.s32 %v141, 24
    %v145 = vstv %s22
    %v146 = vadd.s32 %v141, %v145
    %v147 = vadd.s32 %v142, %v145
    %v148 = vadd.s32 %v143, %v145
    %v149 = vadd.s32 %v144, %v145
    %vm150 = vcmp.eq.s32.totalorder %v139, %v146
    %vm151 = vcmp.eq.s32.totalorder %v139, %v147
    %vm152 = vcmp.eq.s32.totalorder %v139, %v148
    %vm153 = vcmp.eq.s32.totalorder %v139, %v149
    %v154 = vmul.f32 %v134, 1.442695
    %v155 = vpow.pop %v154
    %v156 = vmul.f32 %v135, 1.442695
    %v157 = vpow.pop %v156
    %v158 = vmul.f32 %v136, 1.442695
    %v159 = vpow.pop %v158
    %v160 = vmul.f32 %v137, 1.442695
    %v161 = vpow.pop %v160
    %v162 = vsel %vm150, 0.0, %v155
    %v163 = vsel %vm151, 0.0, %v157
    %v164 = vsel %vm152, 0.0, %v159
    %v165 = vsel %vm153, 0.0, %v161
    %v166 = vsel %vm121, %v162, 0.0
    %167 = vadd.xlane.f32.xlu0 %v166
    %v168 = vpop.xlane.xlu0 %167
    %v169 = vsel %vm121, %v163, 0.0
    %170 = vadd.xlane.f32.xlu0 %v169
    %v171 = vpop.xlane.xlu0 %170
    %v172 = vsel %vm121, %v164, 0.0
    %173 = vadd.xlane.f32.xlu0 %v172
    %v174 = vpop.xlane.xlu0 %173
    %v175 = vsel %vm121, %v165, 0.0
    %176 = vadd.xlane.f32.xlu0 %v175
    %v177 = vpop.xlane.xlu0 %176
    %v178 = vadd.s32 %v146, 16
    %v179 = vadd.s32 %v147, 16
    %v180 = vadd.s32 %v148, 16
    %v181 = vadd.s32 %v149, 16
    %vm182 = vcmp.ge.s32.totalorder %v178, 32
    %vm183 = vcmp.ge.s32.totalorder %v179, 32
    %vm184 = vcmp.ge.s32.totalorder %v180, 32
    %vm185 = vcmp.ge.s32.totalorder %v181, 32
    %v186 = vsub.s32 %v178, 32
    %v187 = vsub.s32 %v179, 32
    %v188 = vsub.s32 %v180, 32
    %v189 = vsub.s32 %v181, 32
    %v190 = vsel %vm182, %v186, %v178
    %v191 = vsel %vm183, %v187, %v179
    %v192 = vsel %vm184, %v188, %v180
    %v193 = vsel %vm185, %v189, %v181
    %vm194 = vcmp.eq.s32.totalorder %v139, %v190
    %vm195 = vcmp.eq.s32.totalorder %v139, %v191
    %vm196 = vcmp.eq.s32.totalorder %v139, %v192
    %vm197 = vcmp.eq.s32.totalorder %v139, %v193
    %v198 = vsel %vm194, %v162, 0.0
    %v199 = vsel %vm195, %v163, 0.0
    %v200 = vsel %vm196, %v164, 0.0
    %v201 = vsel %vm197, %v165, 0.0
    %v202 = vsel %vm121, %v198, 0.0
    %203 = vadd.xlane.f32.xlu0 %v202
    %v204 = vpop.xlane.xlu0 %203
    %v205 = vsel %vm121, %v199, 0.0
    %206 = vadd.xlane.f32.xlu0 %v205
    %v207 = vpop.xlane.xlu0 %206
    %v208 = vsel %vm121, %v200, 0.0
    %209 = vadd.xlane.f32.xlu0 %v208
    %v210 = vpop.xlane.xlu0 %209
    %v211 = vsel %vm121, %v201, 0.0
    %212 = vadd.xlane.f32.xlu0 %v211
    %v213 = vpop.xlane.xlu0 %212
    %v214 = vrcp.pop %v168
    %v215 = vrcp.pop %v171
    %v216 = vrcp.pop %v174
    %v217 = vrcp.pop %v177
    %v218 = vmul.f32 %v204, %v214
    %v219 = vmul.f32 %v207, %v215
    %v220 = vmul.f32 %v210, %v216
    %v221 = vmul.f32 %v213, %v217
    %v222 = vmul.f32 %v162, %v214
    %v223 = vmul.f32 %v163, %v215
    %v224 = vmul.f32 %v164, %v216
    %v225 = vmul.f32 %v165, %v217
    %v226 = vsub.f32 1.0, %v222
    %v227 = vsub.f32 1.0, %v223
    %v228 = vsub.f32 1.0, %v224
    %v229 = vsub.f32 1.0, %v225
    %v230 = vlog2.pop %v226
    %v231 = vmul.f32 %v230, 0.6931472
    %v232 = vlog2.pop %v227
    %v233 = vmul.f32 %v232, 0.6931472
    %v234 = vlog2.pop %v228
    %v235 = vmul.f32 %v234, 0.6931472
    %v236 = vlog2.pop %v229
    %v237 = vmul.f32 %v236, 0.6931472
    %v238 = vsel %vm121, %v231, 0.0
    %239 = vadd.xlane.f32.xlu0 %v238
    %v240 = vpop.xlane.xlu0 %239
    %v241 = vsel %vm121, %v233, 0.0
    %242 = vadd.xlane.f32.xlu0 %v241
    %v243 = vpop.xlane.xlu0 %242
    %v244 = vsel %vm121, %v235, 0.0
    %245 = vadd.xlane.f32.xlu0 %v244
    %v246 = vpop.xlane.xlu0 %245
    %v247 = vsel %vm121, %v237, 0.0
    %248 = vadd.xlane.f32.xlu0 %v247
    %v249 = vpop.xlane.xlu0 %248
    %v250 = vsub.f32 1.0, %v218
    %v251 = vsub.f32 1.0, %v219
    %v252 = vsub.f32 1.0, %v220
    %v253 = vsub.f32 1.0, %v221
    %v254 = vlog2.pop %v250
    %v255 = vmul.f32 %v254, 0.6931472
    %v256 = vlog2.pop %v251
    %v257 = vmul.f32 %v256, 0.6931472
    %v258 = vlog2.pop %v252
    %v259 = vmul.f32 %v258, 0.6931472
    %v260 = vlog2.pop %v253
    %v261 = vmul.f32 %v260, 0.6931472
    %v262 = vsub.f32 %v240, %v255
    %v263 = vsub.f32 %v243, %v257
    %v264 = vsub.f32 %v246, %v259
    %v265 = vsub.f32 %v249, %v261
    %v266 = vlog2.pop %v218
    %v267 = vmul.f32 %v266, 0.6931472
    %v268 = vlog2.pop %v219
    %v269 = vmul.f32 %v268, 0.6931472
    %v270 = vlog2.pop %v220
    %v271 = vmul.f32 %v270, 0.6931472
    %v272 = vlog2.pop %v221
    %v273 = vmul.f32 %v272, 0.6931472
    %v274 = vadd.f32 %v267, %v262
    %v275 = vadd.f32 %v269, %v263
    %v276 = vadd.f32 %v271, %v264
    %v277 = vadd.f32 %v273, %v265
    %vm278 = vcmask 7168
    %279 = vst.msk [vmem:[%s1] sm:$0xff] %vm278, %v274
    %280 = vst.msk [vmem:[%s1 + $0x8] sm:$0xff] %vm278, %v275
    %281 = vst.msk [vmem:[%s1 + $0x10] sm:$0xff] %vm278, %v276
    %282 = vst.msk [vmem:[%s1 + $0x18] sm:$0xff] %vm278, %v277
    // Predicated region
    $region10: #{tpu_custom_call.1} parent=1 // pred_check
      _
    $region11: #{tpu_custom_call.1} parent=1 // pred_check_branch
      %284 = sbr.rel (0) target = $region13
    $region12: #{tpu_custom_call.1} parent=1 // pred_region
      _
    $region13: #{tpu_custom_call.1} parent=1 // pred_fallthru
      _
    // Predicated region
    $region14: #{tpu_custom_call.1} parent=1 // pred_check
      _
    $region15: #{tpu_custom_call.1} parent=1 // pred_check_branch
      %286 = sbr.rel (0) target = $region17
    $region16: #{tpu_custom_call.1} parent=1 // pred_region
      _
    $region17: #{tpu_custom_call.1} parent=1 // pred_fallthru
      _
    %287 = vsyncpa [#allocation3], 1

</llo_original>
